<compile_context>
chip_gen: v7x
topology: tpu7x:2x2x1
jax: 0.10.0
libtpu: 0.0.40
codegen_flags: <defaults>
</compile_context>

<pallas_src>
import functools

import numpy as np
import jax
import jax.numpy as jnp
from jax import lax
from jax.experimental import pallas as pl
from jax.experimental.pallas import tpu as pltpu


def prenorm_kernel(x_ref, w_ref, b_ref, o_ref, *, eps):
    # x_ref: (1, C, TM) tile of (N, C, H*W); stats are per-column (per pixel).
    x = x_ref[0].astype(jnp.float32)                         # (C, TM)
    inv_c = jnp.float32(1.0 / x.shape[0])
    mean = jnp.sum(x, axis=0, keepdims=True) * inv_c         # (1, TM)
    xc = x - mean                                            # reused twice
    var = jnp.sum(xc * xc, axis=0, keepdims=True) * inv_c    # unbiased=False
    xn = xc * lax.rsqrt(var + jnp.float32(eps))              # g folded into W
    # Channel mix (1x1 conv) on the MXU. W arrives pre-cast (bf16 for large C);
    # match xn to it so the MXU gets a homogeneous-operand matmul, f32 accum.
    y = jnp.dot(w_ref[...], xn.astype(w_ref.dtype),
                preferred_element_type=jnp.float32)
    o_ref[0] = (y + b_ref[...]).astype(o_ref.dtype)          # (C,1) bias bcast


def _vmem_budgets():
    """(per-tile working-set budget, Mosaic vmem_limit_bytes), generation-aware."""
    try:
        cap = int(pltpu.get_tpu_info().vmem_capacity_bytes)
    except Exception:
        cap = 64 * 1024 * 1024  # conservative: v7x per-TensorCore VMEM
    vmem_limit = min((cap * 3) // 4, 96 * 1024 * 1024)   # 48 MiB v7x, 96 MiB v5e/v6e
    tile_budget = min((cap * 2) // 5, 48 * 1024 * 1024)  # ~25 MiB v7x, 48 MiB v5e/v6e
    return tile_budget, vmem_limit


def _choose_tile_m(hw, c, in_itemsize, out_itemsize, requested,
                   tile_budget, param_bytes):
    """Lane-tile width: full HW when it fits, else a multiple of 128.

    Per-column VMEM cost = double-buffered input tile + double-buffered output
    tile (native dtype) + ~4 f32 (C, tm) intermediates materialized by the body
    (x, xc, xn, y).  Replicated W/b buffers are subtracted from the budget."""
    budget = max(tile_budget - param_bytes, 1 << 20)
    per_col = c * (2 * in_itemsize + 2 * out_itemsize + 4 * 4)
    max_cols = max(128, budget // per_col)
    limit = min(requested, max_cols)
    if hw <= limit:
        return hw
    cap = max(128, (limit // 128) * 128)
    # Prefer a tile that divides HW (skips the masked vst.msk ragged tail) when
    # one exists reasonably close to the cap.
    tm = cap
    while tm >= max(128, cap // 2):
        if hw % tm == 0:
            return tm
        tm -= 128
    return cap


def prenorm(x_nchw, g, w, b, *, tile_m=8192):
    """x_nchw: (N, C, H, W); g: (C,) LayerNorm scale; w: (C, C) 1x1-conv weight;
    b: (C,) conv bias."""
    N, C, H, W = x_nchw.shape
    HW = H * W
    eps = 1e-5 if x_nchw.dtype == jnp.float32 else 1e-3

    x3 = x_nchw.reshape(N, C, HW)                    # free reshape, no HBM copy
    # Fold LayerNorm scale into the conv:  W @ (xhat * g) == (W * g^T) @ xhat.
    # bf16 operands for large C keep the MXU off the critical path (f32 accum).
    w_dtype = jnp.bfloat16 if C >= 256 else jnp.float32
    w_eff = (w.astype(jnp.float32) *
             g.reshape(1, C).astype(jnp.float32)).astype(w_dtype)
    b_c1 = b.reshape(C, 1).astype(jnp.float32)

    tile_budget, vmem_limit = _vmem_budgets()
    # Replicated-param VMEM (assume 2 buffers each as the conservative case).
    param_bytes = 2 * (C * C * w_eff.dtype.itemsize + C * 4)
    itemsize = x_nchw.dtype.itemsize
    tm = _choose_tile_m(HW, C, itemsize, itemsize, tile_m, tile_budget, param_bytes)

    # v7x shards "parallel" grid axes across its 2 TensorCores: make sure there
    # are enough tiles to keep both busy (no-op for large problems).
    min_tiles = 4
    if N * pl.cdiv(HW, tm) < min_tiles:
        want = pl.cdiv(min_tiles, N)
        if HW // want >= 128:
            tm = max(128, (HW // want) // 128 * 128)

    grid = (N, pl.cdiv(HW, tm))
    kernel = functools.partial(prenorm_kernel, eps=eps)

    def build(single_buffer_params):
        x_spec = pl.BlockSpec((1, C, tm), lambda n, j: (n, 0, j))
        o_spec = pl.BlockSpec((1, C, tm), lambda n, j: (n, 0, j))
        if single_buffer_params:
            # Constant index_map -> no re-DMA needed; single-buffer to save VMEM.
            w_spec = pl.BlockSpec((C, C), lambda n, j: (0, 0),
                                  pipeline_mode=pl.Buffered(1))
            b_spec = pl.BlockSpec((C, 1), lambda n, j: (0, 0),
                                  pipeline_mode=pl.Buffered(1))
        else:
            w_spec = pl.BlockSpec((C, C), lambda n, j: (0, 0))
            b_spec = pl.BlockSpec((C, 1), lambda n, j: (0, 0))
        return pl.pallas_call(
            kernel,
            out_shape=jax.ShapeDtypeStruct((N, C, HW), x_nchw.dtype),
            grid_spec=pltpu.PrefetchScalarGridSpec(
                num_scalar_prefetch=0,
                grid=grid,
                in_specs=[x_spec, w_spec, b_spec],
                out_specs=o_spec,
            ),
            compiler_params=pltpu.CompilerParams(
                dimension_semantics=("parallel", "parallel"),
                vmem_limit_bytes=vmem_limit,
            ),
        )

    try:
        out3 = build(True)(x3, w_eff, b_c1)
    except Exception:
        # pipeline_mode support varies across JAX versions; fall back to the
        # (correct, slightly more VMEM-hungry) default double-buffering.
        out3 = build(False)(x3, w_eff, b_c1)

    return out3.reshape(N, C, H, W)


def prenorm_reference(x_nchw, g, w, b):
    """Pure-JAX reference mirroring the PyTorch module."""
    eps = 1e-5 if x_nchw.dtype == jnp.float32 else 1e-3
    mean = jnp.mean(x_nchw, axis=1, keepdims=True)
    var = jnp.mean((x_nchw - mean) ** 2, axis=1, keepdims=True)
    xn = (x_nchw - mean) * lax.rsqrt(var + eps) * g.reshape(1, -1, 1, 1)
    # fn = 1x1 conv over channels
    y = jnp.einsum('oc,nchw->nohw', w, xn) + b.reshape(1, -1, 1, 1)
    return y


if __name__ == "__main__":
    key = jax.random.PRNGKey(0)
    N, C, H, W = 2, 4, 16, 16

    kx, kw, kb = jax.random.split(key, 3)
    x = jax.random.normal(kx, (N, C, H, W), dtype=jnp.float32)

    # Deterministic parameter init:
    g = jnp.ones((C,), dtype=jnp.float32)                       # LayerNorm.g init = ones
    w = jax.random.normal(kw, (C, C), dtype=jnp.float32) * 0.1  # fn = 1x1 Conv2d weight
    b = jax.random.normal(kb, (C,), dtype=jnp.float32) * 0.1    # fn = 1x1 Conv2d bias

    out = jax.block_until_ready(prenorm(x, g, w, b))
    ref = jax.block_until_ready(prenorm_reference(x, g, w, b))

    assert out.shape == (N, C, H, W)
    np.testing.assert_allclose(np.asarray(out), np.asarray(ref), rtol=1e-5, atol=1e-5)
    print("KERNEL_OK")
</pallas_src>

<mosaic_0001>
module attributes {stable_mosaic.version = 11 : i64} {
  func.func @prenorm_kernel(%arg0: i32, %arg1: i32, %arg2: memref<1x4x128xf32, #tpu.memory_space<vmem>>, %arg3: memref<4x4xf32, #tpu.memory_space<vmem>>, %arg4: memref<4x1xf32, #tpu.memory_space<vmem>>, %arg5: memref<1x4x128xf32, #tpu.memory_space<vmem>>) attributes {dimension_semantics = [#tpu.dimension_semantics<parallel>, #tpu.dimension_semantics<parallel>], iteration_bounds = array<i64: 2, 2>, scalar_prefetch = 0 : i64, scratch_operands = 0 : i64, tpu.core_type = #tpu.core_type<tc>, window_params = [{transform_indices = @transform_0, window_bounds = array<i64: 1, 4, 128>}, {pipeline_mode = #tpu.pipeline_mode<synchronous>, transform_indices = @transform_1, window_bounds = array<i64: 4, 4>}, {pipeline_mode = #tpu.pipeline_mode<synchronous>, transform_indices = @transform_2, window_bounds = array<i64: 4, 1>}, {transform_indices = @transform_3, window_bounds = array<i64: 1, 4, 128>}]} {
    %c0 = arith.constant 0 : index
    %c0_0 = arith.constant 0 : index
    %c0_1 = arith.constant 0 : index
    %0 = vector.load %arg2[%c0, %c0_0, %c0_1] : memref<1x4x128xf32, #tpu.memory_space<vmem>>, vector<1x4x128xf32>
    %1 = vector.shape_cast %0 : vector<1x4x128xf32> to vector<4x128xf32>
    %cst = arith.constant dense<0.000000e+00> : vector<128xf32>
    %2 = vector.multi_reduction <add>, %1, %cst [0] : vector<4x128xf32> to vector<128xf32>
    %3 = vector.shape_cast %2 : vector<128xf32> to vector<1x128xf32>
    %cst_2 = arith.constant 2.500000e-01 : f32
    %4 = vector.broadcast %cst_2 : f32 to vector<1x128xf32>
    %5 = arith.mulf %3, %4 : vector<1x128xf32>
    %6 = vector.broadcast %5 : vector<1x128xf32> to vector<4x128xf32>
    %7 = arith.subf %1, %6 : vector<4x128xf32>
    %8 = arith.mulf %7, %7 : vector<4x128xf32>
    %cst_3 = arith.constant dense<0.000000e+00> : vector<128xf32>
    %9 = vector.multi_reduction <add>, %8, %cst_3 [0] : vector<4x128xf32> to vector<128xf32>
    %10 = vector.shape_cast %9 : vector<128xf32> to vector<1x128xf32>
    %cst_4 = arith.constant 2.500000e-01 : f32
    %11 = vector.broadcast %cst_4 : f32 to vector<1x128xf32>
    %12 = arith.mulf %10, %11 : vector<1x128xf32>
    %cst_5 = arith.constant 9.99999974E-6 : f32
    %13 = vector.broadcast %cst_5 : f32 to vector<1x128xf32>
    %14 = arith.addf %12, %13 : vector<1x128xf32>
    %15 = math.rsqrt %14 : vector<1x128xf32>
    %16 = vector.broadcast %15 : vector<1x128xf32> to vector<4x128xf32>
    %17 = arith.mulf %7, %16 : vector<4x128xf32>
    %c0_6 = arith.constant 0 : index
    %c0_7 = arith.constant 0 : index
    %18 = vector.load %arg3[%c0_6, %c0_7] : memref<4x4xf32, #tpu.memory_space<vmem>>, vector<4x4xf32>
    %cst_8 = arith.constant dense<0.000000e+00> : vector<4x128xf32>
    %19 = tpu.matmul %18, %17, %cst_8 {dimension_numbers = #tpu.dot_dimension_numbers<[1], [0], [0], [1], [0, 0, 1, 1], [], []>} : vector<4x4xf32>, vector<4x128xf32>, vector<4x128xf32> -> vector<4x128xf32>
    %c0_9 = arith.constant 0 : index
    %c0_10 = arith.constant 0 : index
    %20 = vector.load %arg4[%c0_9, %c0_10] : memref<4x1xf32, #tpu.memory_space<vmem>>, vector<4x1xf32>
    %21 = vector.broadcast %20 : vector<4x1xf32> to vector<4x128xf32>
    %22 = arith.addf %19, %21 : vector<4x128xf32>
    %c0_11 = arith.constant 0 : index
    %c0_12 = arith.constant 0 : index
    %c0_13 = arith.constant 0 : index
    %23 = vector.load %arg5[%c0_11, %c0_12, %c0_13] : memref<1x4x128xf32, #tpu.memory_space<vmem>>, vector<1x4x128xf32>
    %24 = vector.shape_cast %23 : vector<1x4x128xf32> to vector<4x128xf32>
    %25 = vector.shape_cast %22 : vector<4x128xf32> to vector<1x4x128xf32>
    tpu.vector_store %arg5[%c0_11, %c0_12, %c0_13], %25 {strides = array<i32>} : memref<1x4x128xf32, #tpu.memory_space<vmem>>, vector<1x4x128xf32>,
    return
  }
  func.func @transform_0(%arg0: i32, %arg1: i32) -> (i32, i32, i32) {
    %c0_i32 = arith.constant 0 : i32
    %c0_i32_0 = arith.constant 0 : i32
    return %arg0, %c0_i32, %arg1 : i32, i32, i32
  }
  func.func @transform_1(%arg0: i32, %arg1: i32) -> (i32, i32) {
    %c0_i32 = arith.constant 0 : i32
    %c0_i32_0 = arith.constant 0 : i32
    %c0_i32_1 = arith.constant 0 : i32
    return %c0_i32, %c0_i32_0 : i32, i32
  }
  func.func @transform_2(%arg0: i32, %arg1: i32) -> (i32, i32) {
    %c0_i32 = arith.constant 0 : i32
    %c0_i32_0 = arith.constant 0 : i32
    %c0_i32_1 = arith.constant 0 : i32
    return %c0_i32, %c0_i32_0 : i32, i32
  }
  func.func @transform_3(%arg0: i32, %arg1: i32) -> (i32, i32, i32) {
    %c0_i32 = arith.constant 0 : i32
    %c0_i32_0 = arith.constant 0 : i32
    return %arg0, %c0_i32, %arg1 : i32, i32, i32
  }
}

module attributes {stable_mosaic.version = 11 : i64} {
  func.func @prenorm_kernel(%arg0: i32, %arg1: i32, %arg2: memref<1x4x128xf32, #tpu.memory_space<vmem>>, %arg3: memref<4x4xf32, #tpu.memory_space<vmem>>, %arg4: memref<4x1xf32, #tpu.memory_space<vmem>>, %arg5: memref<1x4x128xf32, #tpu.memory_space<vmem>>) attributes {dimension_semantics = [#tpu.dimension_semantics<parallel>, #tpu.dimension_semantics<parallel>], iteration_bounds = array<i64: 2, 2>, scalar_prefetch = 0 : i64, scratch_operands = 0 : i64, tpu.core_type = #tpu.core_type<tc>, window_params = [{transform_indices = @transform_0, window_bounds = array<i64: 1, 4, 128>}, {pipeline_mode = #tpu.pipeline_mode<synchronous>, transform_indices = @transform_1, window_bounds = array<i64: 4, 4>}, {pipeline_mode = #tpu.pipeline_mode<synchronous>, transform_indices = @transform_2, window_bounds = array<i64: 4, 1>}, {transform_indices = @transform_3, window_bounds = array<i64: 1, 4, 128>}]} {
    %c0 = arith.constant 0 : index
    %c0_0 = arith.constant 0 : index
    %c0_1 = arith.constant 0 : index
    %0 = vector.load %arg2[%c0, %c0_0, %c0_1] : memref<1x4x128xf32, #tpu.memory_space<vmem>>, vector<1x4x128xf32>
    %1 = vector.shape_cast %0 : vector<1x4x128xf32> to vector<4x128xf32>
    %cst = arith.constant dense<0.000000e+00> : vector<128xf32>
    %2 = vector.multi_reduction <add>, %1, %cst [0] : vector<4x128xf32> to vector<128xf32>
    %3 = vector.shape_cast %2 : vector<128xf32> to vector<1x128xf32>
    %cst_2 = arith.constant 2.500000e-01 : f32
    %4 = vector.broadcast %cst_2 : f32 to vector<1x128xf32>
    %5 = arith.mulf %3, %4 : vector<1x128xf32>
    %6 = vector.broadcast %5 : vector<1x128xf32> to vector<4x128xf32>
    %7 = arith.subf %1, %6 : vector<4x128xf32>
    %8 = arith.mulf %7, %7 : vector<4x128xf32>
    %cst_3 = arith.constant dense<0.000000e+00> : vector<128xf32>
    %9 = vector.multi_reduction <add>, %8, %cst_3 [0] : vector<4x128xf32> to vector<128xf32>
    %10 = vector.shape_cast %9 : vector<128xf32> to vector<1x128xf32>
    %cst_4 = arith.constant 2.500000e-01 : f32
    %11 = vector.broadcast %cst_4 : f32 to vector<1x128xf32>
    %12 = arith.mulf %10, %11 : vector<1x128xf32>
    %cst_5 = arith.constant 9.99999974E-6 : f32
    %13 = vector.broadcast %cst_5 : f32 to vector<1x128xf32>
    %14 = arith.addf %12, %13 : vector<1x128xf32>
    %15 = math.rsqrt %14 : vector<1x128xf32>
    %16 = vector.broadcast %15 : vector<1x128xf32> to vector<4x128xf32>
    %17 = arith.mulf %7, %16 : vector<4x128xf32>
    %c0_6 = arith.constant 0 : index
    %c0_7 = arith.constant 0 : index
    %18 = vector.load %arg3[%c0_6, %c0_7] : memref<4x4xf32, #tpu.memory_space<vmem>>, vector<4x4xf32>
    %cst_8 = arith.constant dense<0.000000e+00> : vector<4x128xf32>
    %19 = tpu.matmul %18, %17, %cst_8 {dimension_numbers = #tpu.dot_dimension_numbers<[1], [0], [0], [1], [0, 0, 1, 1], [], []>} : vector<4x4xf32>, vector<4x128xf32>, vector<4x128xf32> -> vector<4x128xf32>
    %c0_9 = arith.constant 0 : index
    %c0_10 = arith.constant 0 : index
    %20 = vector.load %arg4[%c0_9, %c0_10] : memref<4x1xf32, #tpu.memory_space<vmem>>, vector<4x1xf32>
    %21 = vector.broadcast %20 : vector<4x1xf32> to vector<4x128xf32>
    %22 = arith.addf %19, %21 : vector<4x128xf32>
    %c0_11 = arith.constant 0 : index
    %c0_12 = arith.constant 0 : index
    %c0_13 = arith.constant 0 : index
    %23 = vector.load %arg5[%c0_11, %c0_12, %c0_13] : memref<1x4x128xf32, #tpu.memory_space<vmem>>, vector<1x4x128xf32>
    %24 = vector.shape_cast %23 : vector<1x4x128xf32> to vector<4x128xf32>
    %25 = vector.shape_cast %22 : vector<4x128xf32> to vector<1x4x128xf32>
    tpu.vector_store %arg5[%c0_11, %c0_12, %c0_13], %25 {strides = array<i32>} : memref<1x4x128xf32, #tpu.memory_space<vmem>>, vector<1x4x128xf32>,
    return
  }
  func.func @transform_0(%arg0: i32, %arg1: i32) -> (i32, i32, i32) {
    %c0_i32 = arith.constant 0 : i32
    %c0_i32_0 = arith.constant 0 : i32
    return %arg0, %c0_i32, %arg1 : i32, i32, i32
  }
  func.func @transform_1(%arg0: i32, %arg1: i32) -> (i32, i32) {
    %c0_i32 = arith.constant 0 : i32
    %c0_i32_0 = arith.constant 0 : i32
    %c0_i32_1 = arith.constant 0 : i32
    return %c0_i32, %c0_i32_0 : i32, i32
  }
  func.func @transform_2(%arg0: i32, %arg1: i32) -> (i32, i32) {
    %c0_i32 = arith.constant 0 : i32
    %c0_i32_0 = arith.constant 0 : i32
    %c0_i32_1 = arith.constant 0 : i32
    return %c0_i32, %c0_i32_0 : i32, i32
  }
  func.func @transform_3(%arg0: i32, %arg1: i32) -> (i32, i32, i32) {
    %c0_i32 = arith.constant 0 : i32
    %c0_i32_0 = arith.constant 0 : i32
    return %arg0, %c0_i32, %arg1 : i32, i32, i32
  }
}

</mosaic_0001>

<llo_original>
// kernel: tpu_custom_call.1
$region0: #{tpu_custom_call.1}
  #allocation0 [shape = 'u32[]', space=smem, size = 0x4, offset = 0x4, fixed_abs, tag = 'smem constant byte address 0x4 - core index']
  #allocation1 [shape = 'u32[144,128]{1,0:T(1,128)}', space=vmem, size = 0x12000, scoped, tag = 'internal scratch']
  %s0 = inlined_call_operand.hbm [shape: f32[2,4,256], index: 0, kind: input, shape index: {}]
  %s1 = inlined_call_operand.vmem [shape: f32[4,4], index: 1, kind: input, shape index: {}]
  %s2 = inlined_call_operand.vmem [shape: f32[4,1], index: 2, kind: input, shape index: {}]
  %s3 = inlined_call_operand.hbm [shape: f32[2,4,256], index: 3, kind: output, shape index: {}]
  %s4 = sld [smem:[#allocation0]]
  $region49: #{tpu_custom_call.1} parent=0
    _
  %s6 = ssub.s32 1, %s4
  %s7 = scalar_select 0, %s6, %s4
  $region1: #{tpu_custom_call.1} parent=0
    #allocation2 [shape = 'u8[4096]{0}', space=vmem, size = 0x1000, scoped, tag = 'input window, operand 0']
    #allocation3 [shape = 's32[2]{0}', space=sflag, size = 0x8, scoped, tag = 'scoped memory for tpu_custom_call.1']
    #allocation4 [shape = 's32[2]{0}', space=sflag, size = 0x8, scoped, tag = 'scoped memory for tpu_custom_call.1']
    #allocation5 [shape = 'u8[4096]{0}', space=vmem, size = 0x1000, scoped, tag = 'output window, operand 0']
    %8 = vsyncpa [#allocation3], 0
    %s9 = scalar_lea.sflag [#allocation3], 1
    %10 = vsyncpa %s9, 0
    %11 = vsyncpa [#allocation4], 0
    %s12 = scalar_lea.sflag [#allocation4], 1
    %13 = vsyncpa %s12, 0
    loop: start=0, step=1, limit=6
    $region2: #{tpu_custom_call.1} parent=1 // loop_pre_header
      _
    $region3: #{tpu_custom_call.1} parent=1 // loop_header
      %s15 = sphi 0, %s19
      %p16 = scmp.ge.s32.totalorder %s15, 6
      %s22 = sphi 0, %s34
      %s23 = sphi 0, %s30
      %s24 = sphi 0, %s22
      %s25 = sphi 0, %s23
      %s26 = sphi 0, %s24
      %s27 = sphi 0, %s25
      %s39 = sphi 0, %s41
      %s42 = sphi 0, %s39
      %s43 = sphi 0, %s42
      %s59 = sphi 0, %s43
      %s63 = sphi 0, %s63
      %s65 = sphi 0, %s63
      %s66 = sphi 0, %s65
      %s80 = sphi 0, %s66
      %s84 = sphi 0, %s84
      %s86 = sphi 0, %s84
      %s87 = sphi 0, %s86
      %s101 = sphi 0, %s87
      %s109 = sphi 0, %s111
      %s112 = sphi 0, %s109
      %s113 = sphi 0, %s112
      %s129 = sphi 0, %s113
    $region4: #{tpu_custom_call.1} parent=1 // loop_header_branch
      %18 = sbr.rel (%p16) target = $region8
    $region5: #{tpu_custom_call.1} parent=1 // loop_body
      %s20 = ssub.s32 %s15, 1
      %s21 = ssub.s32 %s15, 2
      %s28 = sadd.s32 1, %s23
      %p29 = scmp.ge.s32.totalorder %s28, 2
      %s30 = scalar_select %p29, 0, %s28
      %s31 = sadd.s32 1, %s22
      %s32 = scalar_select %p29, %s31, %s22
      %p33 = scmp.ge.s32.totalorder %s32, 2
      %s34 = scalar_select %p33, 0, %s32
      %s35 = ssub.s32 %s22, %s34
      %s36 = ssub.s32 %s23, %s30
      %s37 = sor.u32 %s35, %s36
      %p38 = scmp.eq.s32.totalorder %s37, 0
      %s40 = sadd.s32 %s39, 1
      %s41 = scalar_select %p38, %s39, %s40
      %p44 = pneg %p38
      %p45 = scmp.eq.s32.totalorder %s15, 3
      %p46 = por %p44, %p45
      %p47 = scmp.ne.s32.totalorder %s39, %s42
      %p48 = scmp.eq.s32.totalorder %s15, 0
      %p49 = por %p47, %p48
      %p50 = scmp.ne.s32.totalorder %s39, %s42
      %p51 = scmp.eq.s32.totalorder %s20, 3
      %p52 = por %p50, %p51
      %p53 = scmp.ne.s32.totalorder %s42, %s43
      %p54 = scmp.eq.s32.totalorder %s20, 0
      %p55 = por %p53, %p54
      %p56 = scmp.ne.s32.totalorder %s42, %s43
      %p57 = scmp.eq.s32.totalorder %s21, 3
      %p58 = por %p56, %p57
      %p60 = scmp.ne.s32.totalorder %s43, %s59
      %p61 = scmp.eq.s32.totalorder %s21, 0
      %p62 = por %p60, %p61
      %s64 = sadd.s32 %s63, 1
      %p67 = scmp.eq.s32.totalorder %s15, 3
      %p68 = scmp.ne.s32.totalorder %s63, %s65
      %p69 = scmp.eq.s32.totalorder %s15, 0
      %p70 = por %p68, %p69
      %p71 = scmp.ne.s32.totalorder %s63, %s65
      %p72 = scmp.eq.s32.totalorder %s20, 3
      %p73 = por %p71, %p72
      %p74 = scmp.ne.s32.totalorder %s65, %s66
      %p75 = scmp.eq.s32.totalorder %s20, 0
      %p76 = por %p74, %p75
      %p77 = scmp.ne.s32.totalorder %s65, %s66
      %p78 = scmp.eq.s32.totalorder %s21, 3
      %p79 = por %p77, %p78
      %p81 = scmp.ne.s32.totalorder %s66, %s80
      %p82 = scmp.eq.s32.totalorder %s21, 0
      %p83 = por %p81, %p82
      %s85 = sadd.s32 %s84, 1
      %p88 = scmp.eq.s32.totalorder %s15, 3
      %p89 = scmp.ne.s32.totalorder %s84, %s86
      %p90 = scmp.eq.s32.totalorder %s15, 0
      %p91 = por %p89, %p90
      %p92 = scmp.ne.s32.totalorder %s84, %s86
      %p93 = scmp.eq.s32.totalorder %s20, 3
      %p94 = por %p92, %p93
      %p95 = scmp.ne.s32.totalorder %s86, %s87
      %p96 = scmp.eq.s32.totalorder %s20, 0
      %p97 = por %p95, %p96
      %p98 = scmp.ne.s32.totalorder %s86, %s87
      %p99 = scmp.eq.s32.totalorder %s21, 3
      %p100 = por %p98, %p99
      %p102 = scmp.ne.s32.totalorder %s87, %s101
      %p103 = scmp.eq.s32.totalorder %s21, 0
      %p104 = por %p102, %p103
      %s105 = ssub.s32 %s22, %s34
      %s106 = ssub.s32 %s23, %s30
      %s107 = sor.u32 %s105, %s106
      %p108 = scmp.eq.s32.totalorder %s107, 0
      %s110 = sadd.s32 %s109, 1
      %s111 = scalar_select %p108, %s109, %s110
      %p114 = pneg %p108
      %p115 = scmp.eq.s32.totalorder %s15, 3
      %p116 = por %p114, %p115
      %p117 = scmp.ne.s32.totalorder %s109, %s112
      %p118 = scmp.eq.s32.totalorder %s15, 0
      %p119 = por %p117, %p118
      %p120 = scmp.ne.s32.totalorder %s109, %s112
      %p121 = scmp.eq.s32.totalorder %s20, 3
      %p122 = por %p120, %p121
      %p123 = scmp.ne.s32.totalorder %s112, %s113
      %p124 = scmp.eq.s32.totalorder %s20, 0
      %p125 = por %p123, %p124
      %p126 = scmp.ne.s32.totalorder %s112, %s113
      %p127 = scmp.eq.s32.totalorder %s21, 3
      %p128 = por %p126, %p127
      %p130 = scmp.ne.s32.totalorder %s113, %s129
      %p131 = scmp.eq.s32.totalorder %s21, 0
      %p132 = por %p130, %p131
      %p133 = scmp.le.s32.totalorder 1, %s15
      %p134 = scmp.lt.s32.totalorder %s15, 5
      %p135 = pnand %p133, %p134
      %p136 = pneg %p135
      // Predicated region
      $region9: #{tpu_custom_call.1} parent=5 // pred_check
        _
      $region10: #{tpu_custom_call.1} parent=5 // pred_check_branch
        %138 = sbr.rel (%p135) target = $region12
      $region11: #{tpu_custom_call.1} parent=5 // pred_region
        %s139 = ssub.s32 %s15, 1
        // Predicated region
        $region13: #{tpu_custom_call.1} parent=11 // pred_check
          %p140 = pneg %p76
        $region14: #{tpu_custom_call.1} parent=11 // pred_check_branch
          %142 = sbr.rel (%p140) target = $region16
        $region15: #{tpu_custom_call.1} parent=11 // pred_region
          _
        $region16: #{tpu_custom_call.1} parent=11 // pred_fallthru
          _
        // Predicated region
        $region17: #{tpu_custom_call.1} parent=11 // pred_check
          %p143 = pneg %p97
        $region18: #{tpu_custom_call.1} parent=11 // pred_check_branch
          %145 = sbr.rel (%p143) target = $region20
        $region19: #{tpu_custom_call.1} parent=11 // pred_region
          _
        $region20: #{tpu_custom_call.1} parent=11 // pred_fallthru
          _
      $region12: #{tpu_custom_call.1} parent=5 // pred_fallthru
        _
      %p146 = scmp.lt.s32.totalorder %s15, 4
      // Predicated region
      $region21: #{tpu_custom_call.1} parent=5 // pred_check
        %p147 = pneg %p146
      $region22: #{tpu_custom_call.1} parent=5 // pred_check_branch
        %149 = sbr.rel (%p147) target = $region24
      $region23: #{tpu_custom_call.1} parent=5 // pred_region
        // Predicated region
        $region25: #{tpu_custom_call.1} parent=23 // pred_check
          %p150 = pneg %p49
        $region26: #{tpu_custom_call.1} parent=23 // pred_check_branch
          %152 = sbr.rel (%p150) target = $region28
        $region27: #{tpu_custom_call.1} parent=23 // pred_region
          %s153 = sand.u32 %s39, 1
          %s154 = scalar_lea.sflag [#allocation3], %s153
          %s155 = sand.u32 %s39, 1
          %s156 = smul.addr %s155, 4
          %s157 = scalar_lea.vmem [#allocation2], %s156
          %s159 = ssub.s32 64, 64
          %160 = vsyncadd %s154, %s159
          %s161 = smul.addr %s22, 2
          %s162 = sadd.s32 %s23, %s161
          %s163 = smul.addr %s162, 64
          %s164 = scalar_lea.hbm %s0, %s163
          %s166 = sshll.u32 %s157, 4
          %s167 = int_to_ptr.vmem [resolvable:$true] %s166
          %169 = dma.hbm_to_vmem [thread:$0]  %s164, 64, %s167, %s154
        $region28: #{tpu_custom_call.1} parent=23 // pred_fallthru
          _
      $region24: #{tpu_custom_call.1} parent=5 // pred_fallthru
        _
      %p170 = scmp.le.s32.totalorder 1, %s15
      %p171 = scmp.lt.s32.totalorder %s15, 5
      %p172 = pnand %p170, %p171
      %p173 = pneg %p172
      // Predicated region
      $region29: #{tpu_custom_call.1} parent=5 // pred_check
        _
      $region30: #{tpu_custom_call.1} parent=5 // pred_check_branch
        %175 = sbr.rel (%p172) target = $region32
      $region31: #{tpu_custom_call.1} parent=5 // pred_region
        %s176 = ssub.s32 %s15, 1
        %s177 = sand.u32 %s42, 1
        %s178 = scalar_lea.sflag [#allocation3], %s177
        %s179 = sand.u32 %s42, 1
        %s180 = smul.addr %s179, 4
        %s181 = scalar_lea.vmem [#allocation2], %s180
        // Predicated region
        $region33: #{tpu_custom_call.1} parent=31 // pred_check
          %p182 = pneg %p55
        $region34: #{tpu_custom_call.1} parent=31 // pred_check_branch
          %184 = sbr.rel (%p182) target = $region36
        $region35: #{tpu_custom_call.1} parent=31 // pred_region
          %185 = dma.done %s178, 64
        $region36: #{tpu_custom_call.1} parent=31 // pred_fallthru
          _
        %s186 = sand.u32 %s42, 1
        %s187 = scalar_lea.sflag [#allocation3], %s186
        %s188 = sand.u32 %s42, 1
        %s189 = smul.addr %s188, 4
        %s190 = scalar_lea.vmem [#allocation2], %s189
        %p191 = pneg %p55
        %p192 = pneg %p52
        %p193 = pneg %p76
        %p194 = pneg %p73
        %p195 = pneg %p97
        %p196 = pneg %p94
        %p197 = pneg %p125
        %p198 = pneg %p122
        %s199 = sand.u32 %s112, 1
        %s200 = scalar_lea.sflag [#allocation4], %s199
        %s201 = sand.u32 %s112, 1
        %s202 = smul.addr %s201, 4
        %s203 = scalar_lea.vmem [#allocation5], %s202
        %v204 = vld [vmem:[%s181] sm:$0xf]
        %vm205 = vcmask 1043456
        %v206 = vsel %vm205, %v204, 0.0
        %v207 = vrot.slane %v206, 4
        %v208 = vadd.f32 %v206, %v207
        %v209 = vrot.slane %v208, 2
        %v210 = vadd.f32 %v208, %v209
        %v211 = vrot.slane %v210, 1
        %v212 = vadd.f32 %v210, %v211
        %v213 = vmul.f32 %v212, 0.25
        %v214 = vsub.f32 %v204, %v213
        %v215 = vmul.f32 %v214, %v214
        %v216 = vsel %vm205, %v215, 0.0
        %v217 = vrot.slane %v216, 4
        %v218 = vadd.f32 %v216, %v217
        %v219 = vrot.slane %v218, 2
        %v220 = vadd.f32 %v218, %v219
        %v221 = vrot.slane %v220, 1
        %v222 = vadd.f32 %v220, %v221
        %v223 = vmul.f32 %v222, 0.25
        %v224 = vadd.f32 %v223, 1e-05
        %v225 = vrsqrt.pop %v224
        %v226 = vmul.f32 %v214, %v225
        %v227 = vld [vmem:[%s1] sm:$0xf]
        %v228 = vld [vmem:[%s2] sm:$0xf]
        %230 = vset.pattern.permute.xlu0 0
        %231 = vperm.xlu0 %230, %v228
        %v232 = vpop.permute.xlu0 %231
        %vm234 = vcmask 31744
        %v236 = vsel %vm234, %v227, 0
        %v239 = vsel %vm205, %v226, 0
        %241 = vmatprep.subr.mxu0 0.0
        %242 = vmatpush1.msra.mxu0 %v239
        %243 = vmatprep.subr.mxu0 0.0
        %244 = vmatpush1.msra.mxu0 0.0
        %245 = vmatprep.subr.mxu0 0.0
        %246 = vmatpush1.msra.mxu0 0.0
        %247 = vmatprep.subr.mxu0 0.0
        %248 = vmatpush1.msra.mxu0 0.0
        %249 = vmatprep.subr.mxu0 0.0
        %250 = vmatpush1.msra.mxu0 0.0
        %251 = vmatprep.subr.mxu0 0.0
        %252 = vmatpush1.msra.mxu0 0.0
        %253 = vmatprep.subr.mxu0 0.0
        %254 = vmatpush1.msra.mxu0 0.0
        %255 = vmatprep.subr.mxu0 0.0
        %256 = vmatpush1.msra.mxu0 0.0
        %257 = vmatprep.subr.mxu0 0.0
        %258 = vmatpush1.msra.mxu0 0.0
        %259 = vmatprep.subr.mxu0 0.0
        %260 = vmatpush1.msra.mxu0 0.0
        %261 = vmatprep.subr.mxu0 0.0
        %262 = vmatpush1.msra.mxu0 0.0
        %263 = vmatprep.subr.mxu0 0.0
        %264 = vmatpush1.msra.mxu0 0.0
        %265 = vmatprep.subr.mxu0 0.0
        %266 = vmatpush1.msra.mxu0 0.0
        %267 = vmatprep.subr.mxu0 0.0
        %268 = vmatpush1.msra.mxu0 0.0
        %269 = vmatprep.subr.mxu0 0.0
        %270 = vmatpush1.msra.mxu0 0.0
        %271 = vmatprep.subr.mxu0 0.0
        %272 = vmatpush1.msra.mxu0 0.0
        %273 = vmatprep.subr.mxu0 0.0
        %274 = vmatpush1.msra.mxu0 0.0
        %275 = vmatprep.subr.mxu0 0.0
        %276 = vmatpush1.msra.mxu0 0.0
        %277 = vmatprep.subr.mxu0 0.0
        %278 = vmatpush1.msra.mxu0 0.0
        %279 = vmatprep.subr.mxu0 0.0
        %280 = vmatpush1.msra.mxu0 0.0
        %281 = vmatprep.subr.mxu0 0.0
        %282 = vmatpush1.msra.mxu0 0.0
        %283 = vmatprep.subr.mxu0 0.0
        %284 = vmatpush1.msra.mxu0 0.0
        %285 = vmatprep.subr.mxu0 0.0
        %286 = vmatpush1.msra.mxu0 0.0
        %287 = vmatprep.subr.mxu0 0.0
        %288 = vmatpush1.msra.mxu0 0.0
        %289 = vmatprep.subr.mxu0 0.0
        %290 = vmatpush1.msra.mxu0 0.0
        %291 = vmatprep.subr.mxu0 0.0
        %292 = vmatpush1.msra.mxu0 0.0
        %293 = vmatprep.subr.mxu0 0.0
        %294 = vmatpush1.msra.mxu0 0.0
        %295 = vmatprep.subr.mxu0 0.0
        %296 = vmatpush1.msra.mxu0 0.0
        %297 = vmatprep.subr.mxu0 0.0
        %298 = vmatpush1.msra.mxu0 0.0
        %299 = vmatprep.subr.mxu0 0.0
        %300 = vmatpush1.msra.mxu0 0.0
        %301 = vmatprep.subr.mxu0 0.0
        %302 = vmatpush1.msra.mxu0 0.0
        %303 = vmatprep.subr.mxu0 0.0
        %304 = vmatpush1.msra.mxu0 0.0
        %305 = vmatprep.mubr.f32.mxu0 0.0
        %306 = vmatmul.mubr.f32.gmra.mrb[0].mxu0 %v236
        %v307 = vpop.f32.mrb[0].mxu0
        %v308 = vadd.f32 %v232, %v307
        %v309 = vpop.f32.mrb[0].mxu0
        %310 = vdwg.mxu0
        %311 = vst [vmem:[%s203] sm:$0xf] %v308
        %s312 = sand.u32 %s112, 1
        %s313 = scalar_lea.sflag [#allocation4], %s312
        %s314 = sand.u32 %s112, 1
        %s315 = smul.addr %s314, 4
        %s316 = scalar_lea.vmem [#allocation5], %s315
        // Predicated region
        $region37: #{tpu_custom_call.1} parent=31 // pred_check
          %p317 = pneg %p122
        $region38: #{tpu_custom_call.1} parent=31 // pred_check_branch
          %319 = sbr.rel (%p317) target = $region40
        $region39: #{tpu_custom_call.1} parent=31 // pred_region
          %s321 = ssub.s32 64, 64
          %322 = vsyncadd %s313, %s321
          %s323 = smul.addr %s24, 2
          %s324 = sadd.s32 %s25, %s323
          %s325 = smul.addr %s324, 64
          %s326 = scalar_lea.hbm %s3, %s325
          %s328 = sshll.u32 %s316, 4
          %s329 = int_to_ptr.vmem [resolvable:$true] %s328
          %331 = dma.vmem_to_hbm [thread:$0]  %s329, 64, %s326, %s313
        $region40: #{tpu_custom_call.1} parent=31 // pred_fallthru
          _
      $region32: #{tpu_custom_call.1} parent=5 // pred_fallthru
        _
      %p332 = scmp.le.s32.totalorder 2, %s15
      // Predicated region
      $region41: #{tpu_custom_call.1} parent=5 // pred_check
        %p333 = pneg %p332
      $region42: #{tpu_custom_call.1} parent=5 // pred_check_branch
        %335 = sbr.rel (%p333) target = $region44
      $region43: #{tpu_custom_call.1} parent=5 // pred_region
        %s336 = ssub.s32 %s15, 2
        // Predicated region
        $region45: #{tpu_custom_call.1} parent=43 // pred_check
          %p337 = pneg %p128
        $region46: #{tpu_custom_call.1} parent=43 // pred_check_branch
          %339 = sbr.rel (%p337) target = $region48
        $region47: #{tpu_custom_call.1} parent=43 // pred_region
          %s340 = sand.u32 %s113, 1
          %s341 = scalar_lea.sflag [#allocation4], %s340
          %s342 = sand.u32 %s113, 1
          %s343 = smul.addr %s342, 4
          %s344 = scalar_lea.vmem [#allocation5], %s343
          %345 = dma.done %s341, 64
        $region48: #{tpu_custom_call.1} parent=43 // pred_fallthru
          _
      $region44: #{tpu_custom_call.1} parent=5 // pred_fallthru
        _
    $region6: #{tpu_custom_call.1} parent=1 // loop_footer
      %s19 = sadd.s32 1, %s15
    $region7: #{tpu_custom_call.1} parent=1 // loop_footer_branch
      %14 = sbr.rel target = $region3
    $region8: #{tpu_custom_call.1} parent=1 // loop_exit
      _
    %346 = vsyncpa [#allocation3], 1
    %s347 = scalar_lea.sflag [#allocation3], 1
    %348 = vsyncpa %s347, 1
    %349 = vsyncpa [#allocation4], 1
    %s350 = scalar_lea.sflag [#allocation4], 1
    %351 = vsyncpa %s350, 1

// kernel: tpu_custom_call.1
$region0: #{tpu_custom_call.1}
  #allocation0 [shape = 'u32[]', space=smem, size = 0x4, offset = 0x4, fixed_abs, tag = 'smem constant byte address 0x4 - core index']
  #allocation1 [shape = 'u32[144,128]{1,0:T(1,128)}', space=vmem, size = 0x12000, scoped, tag = 'internal scratch']
  %s0 = inlined_call_operand.hbm [shape: f32[2,4,256], index: 0, kind: input, shape index: {}]
  %s1 = inlined_call_operand.vmem [shape: f32[4,4], index: 1, kind: input, shape index: {}]
  %s2 = inlined_call_operand.vmem [shape: f32[4,1], index: 2, kind: input, shape index: {}]
  %s3 = inlined_call_operand.hbm [shape: f32[2,4,256], index: 3, kind: output, shape index: {}]
  %s4 = sld [smem:[#allocation0]]
  $region49: #{tpu_custom_call.1} parent=0
    _
  %s6 = ssub.s32 1, %s4
  %s7 = scalar_select 0, %s6, %s4
  $region1: #{tpu_custom_call.1} parent=0
    #allocation2 [shape = 'u8[4096]{0}', space=vmem, size = 0x1000, scoped, tag = 'input window, operand 0']
    #allocation3 [shape = 's32[2]{0}', space=sflag, size = 0x8, scoped, tag = 'scoped memory for tpu_custom_call.1']
    #allocation4 [shape = 's32[2]{0}', space=sflag, size = 0x8, scoped, tag = 'scoped memory for tpu_custom_call.1']
    #allocation5 [shape = 'u8[4096]{0}', space=vmem, size = 0x1000, scoped, tag = 'output window, operand 0']
    %8 = vsyncpa [#allocation3], 0
    %s9 = scalar_lea.sflag [#allocation3], 1
    %10 = vsyncpa %s9, 0
    %11 = vsyncpa [#allocation4], 0
    %s12 = scalar_lea.sflag [#allocation4], 1
    %13 = vsyncpa %s12, 0
    loop: start=0, step=1, limit=6
    $region2: #{tpu_custom_call.1} parent=1 // loop_pre_header
      _
    $region3: #{tpu_custom_call.1} parent=1 // loop_header
      %s15 = sphi 0, %s19
      %p16 = scmp.ge.s32.totalorder %s15, 6
      %s22 = sphi 0, %s34
      %s23 = sphi 0, %s30
      %s24 = sphi 0, %s22
      %s25 = sphi 0, %s23
      %s26 = sphi 0, %s24
      %s27 = sphi 0, %s25
      %s39 = sphi 0, %s41
      %s42 = sphi 0, %s39
      %s43 = sphi 0, %s42
      %s59 = sphi 0, %s43
      %s63 = sphi 0, %s63
      %s65 = sphi 0, %s63
      %s66 = sphi 0, %s65
      %s80 = sphi 0, %s66
      %s84 = sphi 0, %s84
      %s86 = sphi 0, %s84
      %s87 = sphi 0, %s86
      %s101 = sphi 0, %s87
      %s109 = sphi 0, %s111
      %s112 = sphi 0, %s109
      %s113 = sphi 0, %s112
      %s129 = sphi 0, %s113
    $region4: #{tpu_custom_call.1} parent=1 // loop_header_branch
      %18 = sbr.rel (%p16) target = $region8
    $region5: #{tpu_custom_call.1} parent=1 // loop_body
      %s20 = ssub.s32 %s15, 1
      %s21 = ssub.s32 %s15, 2
      %s28 = sadd.s32 1, %s23
      %p29 = scmp.ge.s32.totalorder %s28, 2
      %s30 = scalar_select %p29, 0, %s28
      %s31 = sadd.s32 1, %s22
      %s32 = scalar_select %p29, %s31, %s22
      %p33 = scmp.ge.s32.totalorder %s32, 2
      %s34 = scalar_select %p33, 0, %s32
      %s35 = ssub.s32 %s22, %s34
      %s36 = ssub.s32 %s23, %s30
      %s37 = sor.u32 %s35, %s36
      %p38 = scmp.eq.s32.totalorder %s37, 0
      %s40 = sadd.s32 %s39, 1
      %s41 = scalar_select %p38, %s39, %s40
      %p44 = pneg %p38
      %p45 = scmp.eq.s32.totalorder %s15, 3
      %p46 = por %p44, %p45
      %p47 = scmp.ne.s32.totalorder %s39, %s42
      %p48 = scmp.eq.s32.totalorder %s15, 0
      %p49 = por %p47, %p48
      %p50 = scmp.ne.s32.totalorder %s39, %s42
      %p51 = scmp.eq.s32.totalorder %s20, 3
      %p52 = por %p50, %p51
      %p53 = scmp.ne.s32.totalorder %s42, %s43
      %p54 = scmp.eq.s32.totalorder %s20, 0
      %p55 = por %p53, %p54
      %p56 = scmp.ne.s32.totalorder %s42, %s43
      %p57 = scmp.eq.s32.totalorder %s21, 3
      %p58 = por %p56, %p57
      %p60 = scmp.ne.s32.totalorder %s43, %s59
      %p61 = scmp.eq.s32.totalorder %s21, 0
      %p62 = por %p60, %p61
      %s64 = sadd.s32 %s63, 1
      %p67 = scmp.eq.s32.totalorder %s15, 3
      %p68 = scmp.ne.s32.totalorder %s63, %s65
      %p69 = scmp.eq.s32.totalorder %s15, 0
      %p70 = por %p68, %p69
      %p71 = scmp.ne.s32.totalorder %s63, %s65
      %p72 = scmp.eq.s32.totalorder %s20, 3
      %p73 = por %p71, %p72
      %p74 = scmp.ne.s32.totalorder %s65, %s66
      %p75 = scmp.eq.s32.totalorder %s20, 0
      %p76 = por %p74, %p75
      %p77 = scmp.ne.s32.totalorder %s65, %s66
      %p78 = scmp.eq.s32.totalorder %s21, 3
      %p79 = por %p77, %p78
      %p81 = scmp.ne.s32.totalorder %s66, %s80
      %p82 = scmp.eq.s32.totalorder %s21, 0
      %p83 = por %p81, %p82
      %s85 = sadd.s32 %s84, 1
      %p88 = scmp.eq.s32.totalorder %s15, 3
      %p89 = scmp.ne.s32.totalorder %s84, %s86
      %p90 = scmp.eq.s32.totalorder %s15, 0
      %p91 = por %p89, %p90
      %p92 = scmp.ne.s32.totalorder %s84, %s86
      %p93 = scmp.eq.s32.totalorder %s20, 3
      %p94 = por %p92, %p93
      %p95 = scmp.ne.s32.totalorder %s86, %s87
      %p96 = scmp.eq.s32.totalorder %s20, 0
      %p97 = por %p95, %p96
      %p98 = scmp.ne.s32.totalorder %s86, %s87
      %p99 = scmp.eq.s32.totalorder %s21, 3
      %p100 = por %p98, %p99
      %p102 = scmp.ne.s32.totalorder %s87, %s101
      %p103 = scmp.eq.s32.totalorder %s21, 0
      %p104 = por %p102, %p103
      %s105 = ssub.s32 %s22, %s34
      %s106 = ssub.s32 %s23, %s30
      %s107 = sor.u32 %s105, %s106
      %p108 = scmp.eq.s32.totalorder %s107, 0
      %s110 = sadd.s32 %s109, 1
      %s111 = scalar_select %p108, %s109, %s110
      %p114 = pneg %p108
      %p115 = scmp.eq.s32.totalorder %s15, 3
      %p116 = por %p114, %p115
      %p117 = scmp.ne.s32.totalorder %s109, %s112
      %p118 = scmp.eq.s32.totalorder %s15, 0
      %p119 = por %p117, %p118
      %p120 = scmp.ne.s32.totalorder %s109, %s112
      %p121 = scmp.eq.s32.totalorder %s20, 3
      %p122 = por %p120, %p121
      %p123 = scmp.ne.s32.totalorder %s112, %s113
      %p124 = scmp.eq.s32.totalorder %s20, 0
      %p125 = por %p123, %p124
      %p126 = scmp.ne.s32.totalorder %s112, %s113
      %p127 = scmp.eq.s32.totalorder %s21, 3
      %p128 = por %p126, %p127
      %p130 = scmp.ne.s32.totalorder %s113, %s129
      %p131 = scmp.eq.s32.totalorder %s21, 0
      %p132 = por %p130, %p131
      %p133 = scmp.le.s32.totalorder 1, %s15
      %p134 = scmp.lt.s32.totalorder %s15, 5
      %p135 = pnand %p133, %p134
      %p136 = pneg %p135
      // Predicated region
      $region9: #{tpu_custom_call.1} parent=5 // pred_check
        _
      $region10: #{tpu_custom_call.1} parent=5 // pred_check_branch
        %138 = sbr.rel (%p135) target = $region12
      $region11: #{tpu_custom_call.1} parent=5 // pred_region
        %s139 = ssub.s32 %s15, 1
        // Predicated region
        $region13: #{tpu_custom_call.1} parent=11 // pred_check
          %p140 = pneg %p76
        $region14: #{tpu_custom_call.1} parent=11 // pred_check_branch
          %142 = sbr.rel (%p140) target = $region16
        $region15: #{tpu_custom_call.1} parent=11 // pred_region
          _
        $region16: #{tpu_custom_call.1} parent=11 // pred_fallthru
          _
        // Predicated region
        $region17: #{tpu_custom_call.1} parent=11 // pred_check
          %p143 = pneg %p97
        $region18: #{tpu_custom_call.1} parent=11 // pred_check_branch
          %145 = sbr.rel (%p143) target = $region20
        $region19: #{tpu_custom_call.1} parent=11 // pred_region
          _
        $region20: #{tpu_custom_call.1} parent=11 // pred_fallthru
          _
      $region12: #{tpu_custom_call.1} parent=5 // pred_fallthru
        _
      %p146 = scmp.lt.s32.totalorder %s15, 4
      // Predicated region
      $region21: #{tpu_custom_call.1} parent=5 // pred_check
        %p147 = pneg %p146
      $region22: #{tpu_custom_call.1} parent=5 // pred_check_branch
        %149 = sbr.rel (%p147) target = $region24
      $region23: #{tpu_custom_call.1} parent=5 // pred_region
        // Predicated region
        $region25: #{tpu_custom_call.1} parent=23 // pred_check
          %p150 = pneg %p49
        $region26: #{tpu_custom_call.1} parent=23 // pred_check_branch
          %152 = sbr.rel (%p150) target = $region28
        $region27: #{tpu_custom_call.1} parent=23 // pred_region
          %s153 = sand.u32 %s39, 1
          %s154 = scalar_lea.sflag [#allocation3], %s153
          %s155 = sand.u32 %s39, 1
          %s156 = smul.addr %s155, 4
          %s157 = scalar_lea.vmem [#allocation2], %s156
          %s159 = ssub.s32 64, 64
          %160 = vsyncadd %s154, %s159
          %s161 = smul.addr %s22, 2
          %s162 = sadd.s32 %s23, %s161
          %s163 = smul.addr %s162, 64
          %s164 = scalar_lea.hbm %s0, %s163
          %s166 = sshll.u32 %s157, 4
          %s167 = int_to_ptr.vmem [resolvable:$true] %s166
          %169 = dma.hbm_to_vmem [thread:$0]  %s164, 64, %s167, %s154
        $region28: #{tpu_custom_call.1} parent=23 // pred_fallthru
          _
      $region24: #{tpu_custom_call.1} parent=5 // pred_fallthru
        _
      %p170 = scmp.le.s32.totalorder 1, %s15
      %p171 = scmp.lt.s32.totalorder %s15, 5
      %p172 = pnand %p170, %p171
      %p173 = pneg %p172
      // Predicated region
      $region29: #{tpu_custom_call.1} parent=5 // pred_check
        _
      $region30: #{tpu_custom_call.1} parent=5 // pred_check_branch
        %175 = sbr.rel (%p172) target = $region32
      $region31: #{tpu_custom_call.1} parent=5 // pred_region
        %s176 = ssub.s32 %s15, 1
        %s177 = sand.u32 %s42, 1
        %s178 = scalar_lea.sflag [#allocation3], %s177
        %s179 = sand.u32 %s42, 1
        %s180 = smul.addr %s179, 4
        %s181 = scalar_lea.vmem [#allocation2], %s180
        // Predicated region
        $region33: #{tpu_custom_call.1} parent=31 // pred_check
          %p182 = pneg %p55
        $region34: #{tpu_custom_call.1} parent=31 // pred_check_branch
          %184 = sbr.rel (%p182) target = $region36
        $region35: #{tpu_custom_call.1} parent=31 // pred_region
          %185 = dma.done %s178, 64
        $region36: #{tpu_custom_call.1} parent=31 // pred_fallthru
          _
        %s186 = sand.u32 %s42, 1
        %s187 = scalar_lea.sflag [#allocation3], %s186
        %s188 = sand.u32 %s42, 1
        %s189 = smul.addr %s188, 4
        %s190 = scalar_lea.vmem [#allocation2], %s189
        %p191 = pneg %p55
        %p192 = pneg %p52
        %p193 = pneg %p76
        %p194 = pneg %p73
        %p195 = pneg %p97
        %p196 = pneg %p94
        %p197 = pneg %p125
        %p198 = pneg %p122
        %s199 = sand.u32 %s112, 1
        %s200 = scalar_lea.sflag [#allocation4], %s199
        %s201 = sand.u32 %s112, 1
        %s202 = smul.addr %s201, 4
        %s203 = scalar_lea.vmem [#allocation5], %s202
        %v204 = vld [vmem:[%s181] sm:$0xf]
        %vm205 = vcmask 1043456
        %v206 = vsel %vm205, %v204, 0.0
        %v207 = vrot.slane %v206, 4
        %v208 = vadd.f32 %v206, %v207
        %v209 = vrot.slane %v208, 2
        %v210 = vadd.f32 %v208, %v209
        %v211 = vrot.slane %v210, 1
        %v212 = vadd.f32 %v210, %v211
        %v213 = vmul.f32 %v212, 0.25
        %v214 = vsub.f32 %v204, %v213
        %v215 = vmul.f32 %v214, %v214
        %v216 = vsel %vm205, %v215, 0.0
        %v217 = vrot.slane %v216, 4
        %v218 = vadd.f32 %v216, %v217
        %v219 = vrot.slane %v218, 2
        %v220 = vadd.f32 %v218, %v219
        %v221 = vrot.slane %v220, 1
        %v222 = vadd.f32 %v220, %v221
        %v223 = vmul.f32 %v222, 0.25
        %v224 = vadd.f32 %v223, 1e-05
        %v225 = vrsqrt.pop %v224
        %v226 = vmul.f32 %v214, %v225
        %v227 = vld [vmem:[%s1] sm:$0xf]
        %v228 = vld [vmem:[%s2] sm:$0xf]
        %230 = vset.pattern.permute.xlu0 0
        %231 = vperm.xlu0 %230, %v228
        %v232 = vpop.permute.xlu0 %231
        %vm234 = vcmask 31744
        %v236 = vsel %vm234, %v227, 0
        %v239 = vsel %vm205, %v226, 0
        %241 = vmatprep.subr.mxu0 0.0
        %242 = vmatpush1.msra.mxu0 %v239
        %243 = vmatprep.subr.mxu0 0.0
        %244 = vmatpush1.msra.mxu0 0.0
        %245 = vmatprep.subr.mxu0 0.0
        %246 = vmatpush1.msra.mxu0 0.0
        %247 = vmatprep.subr.mxu0 0.0
        %248 = vmatpush1.msra.mxu0 0.0
        %249 = vmatprep.subr.mxu0 0.0
        %250 = vmatpush1.msra.mxu0 0.0
        %251 = vmatprep.subr.mxu0 0.0
        %252 = vmatpush1.msra.mxu0 0.0
        %253 = vmatprep.subr.mxu0 0.0
        %254 = vmatpush1.msra.mxu0 0.0
        %255 = vmatprep.subr.mxu0 0.0
        %256 = vmatpush1.msra.mxu0 0.0
        %257 = vmatprep.subr.mxu0 0.0
        %258 = vmatpush1.msra.mxu0 0.0
        %259 = vmatprep.subr.mxu0 0.0
        %260 = vmatpush1.msra.mxu0 0.0
        %261 = vmatprep.subr.mxu0 0.0
        %262 = vmatpush1.msra.mxu0 0.0
        %263 = vmatprep.subr.mxu0 0.0
        %264 = vmatpush1.msra.mxu0 0.0
        %265 = vmatprep.subr.mxu0 0.0
        %266 = vmatpush1.msra.mxu0 0.0
        %267 = vmatprep.subr.mxu0 0.0
        %268 = vmatpush1.msra.mxu0 0.0
        %269 = vmatprep.subr.mxu0 0.0
        %270 = vmatpush1.msra.mxu0 0.0
        %271 = vmatprep.subr.mxu0 0.0
        %272 = vmatpush1.msra.mxu0 0.0
        %273 = vmatprep.subr.mxu0 0.0
        %274 = vmatpush1.msra.mxu0 0.0
        %275 = vmatprep.subr.mxu0 0.0
        %276 = vmatpush1.msra.mxu0 0.0
        %277 = vmatprep.subr.mxu0 0.0
        %278 = vmatpush1.msra.mxu0 0.0
        %279 = vmatprep.subr.mxu0 0.0
        %280 = vmatpush1.msra.mxu0 0.0
        %281 = vmatprep.subr.mxu0 0.0
        %282 = vmatpush1.msra.mxu0 0.0
        %283 = vmatprep.subr.mxu0 0.0
        %284 = vmatpush1.msra.mxu0 0.0
        %285 = vmatprep.subr.mxu0 0.0
        %286 = vmatpush1.msra.mxu0 0.0
        %287 = vmatprep.subr.mxu0 0.0
        %288 = vmatpush1.msra.mxu0 0.0
        %289 = vmatprep.subr.mxu0 0.0
        %290 = vmatpush1.msra.mxu0 0.0
        %291 = vmatprep.subr.mxu0 0.0
        %292 = vmatpush1.msra.mxu0 0.0
        %293 = vmatprep.subr.mxu0 0.0
        %294 = vmatpush1.msra.mxu0 0.0
        %295 = vmatprep.subr.mxu0 0.0
        %296 = vmatpush1.msra.mxu0 0.0
        %297 = vmatprep.subr.mxu0 0.0
        %298 = vmatpush1.msra.mxu0 0.0
        %299 = vmatprep.subr.mxu0 0.0
        %300 = vmatpush1.msra.mxu0 0.0
        %301 = vmatprep.subr.mxu0 0.0
        %302 = vmatpush1.msra.mxu0 0.0
        %303 = vmatprep.subr.mxu0 0.0
        %304 = vmatpush1.msra.mxu0 0.0
        %305 = vmatprep.mubr.f32.mxu0 0.0
        %306 = vmatmul.mubr.f32.gmra.mrb[0].mxu0 %v236
        %v307 = vpop.f32.mrb[0].mxu0
        %v308 = vadd.f32 %v232, %v307
        %v309 = vpop.f32.mrb[0].mxu0
        %310 = vdwg.mxu0
        %311 = vst [vmem:[%s203] sm:$0xf] %v308
        %s312 = sand.u32 %s112, 1
        %s313 = scalar_lea.sflag [#allocation4], %s312
        %s314 = sand.u32 %s112, 1
        %s315 = smul.addr %s314, 4
        %s316 = scalar_lea.vmem [#allocation5], %s315
        // Predicated region
        $region37: #{tpu_custom_call.1} parent=31 // pred_check
          %p317 = pneg %p122
        $region38: #{tpu_custom_call.1} parent=31 // pred_check_branch
          %319 = sbr.rel (%p317) target = $region40
        $region39: #{tpu_custom_call.1} parent=31 // pred_region
          %s321 = ssub.s32 64, 64
          %322 = vsyncadd %s313, %s321
          %s323 = smul.addr %s24, 2
          %s324 = sadd.s32 %s25, %s323
          %s325 = smul.addr %s324, 64
          %s326 = scalar_lea.hbm %s3, %s325
          %s328 = sshll.u32 %s316, 4
          %s329 = int_to_ptr.vmem [resolvable:$true] %s328
          %331 = dma.vmem_to_hbm [thread:$0]  %s329, 64, %s326, %s313
        $region40: #{tpu_custom_call.1} parent=31 // pred_fallthru
          _
      $region32: #{tpu_custom_call.1} parent=5 // pred_fallthru
        _
      %p332 = scmp.le.s32.totalorder 2, %s15
      // Predicated region
      $region41: #{tpu_custom_call.1} parent=5 // pred_check
        %p333 = pneg %p332
      $region42: #{tpu_custom_call.1} parent=5 // pred_check_branch
        %335 = sbr.rel (%p333) target = $region44
      $region43: #{tpu_custom_call.1} parent=5 // pred_region
        %s336 = ssub.s32 %s15, 2
        // Predicated region
        $region45: #{tpu_custom_call.1} parent=43 // pred_check
          %p337 = pneg %p128
        $region46: #{tpu_custom_call.1} parent=43 // pred_check_branch
          %339 = sbr.rel (%p337) target = $region48
        $region47: #{tpu_custom_call.1} parent=43 // pred_region
          %s340 = sand.u32 %s113, 1
          %s341 = scalar_lea.sflag [#allocation4], %s340
          %s342 = sand.u32 %s113, 1
          %s343 = smul.addr %s342, 4
          %s344 = scalar_lea.vmem [#allocation5], %s343
          %345 = dma.done %s341, 64
        $region48: #{tpu_custom_call.1} parent=43 // pred_fallthru
          _
      $region44: #{tpu_custom_call.1} parent=5 // pred_fallthru
        _
    $region6: #{tpu_custom_call.1} parent=1 // loop_footer
      %s19 = sadd.s32 1, %s15
    $region7: #{tpu_custom_call.1} parent=1 // loop_footer_branch
      %14 = sbr.rel target = $region3
    $region8: #{tpu_custom_call.1} parent=1 // loop_exit
      _
    %346 = vsyncpa [#allocation3], 1
    %s347 = scalar_lea.sflag [#allocation3], 1
    %348 = vsyncpa %s347, 1
    %349 = vsyncpa [#allocation4], 1
    %s350 = scalar_lea.sflag [#allocation4], 1
    %351 = vsyncpa %s350, 1

</llo_original>
